<compile_context>
chip_gen: v6e
topology: v6e:2x2x1
jax: 0.10.0
libtpu: 0.0.40
codegen_flags: <defaults>
</compile_context>

<pallas_src>
import numpy as np
import jax
import jax.numpy as jnp
from jax.experimental import pallas as pl
from jax.experimental.pallas import tpu as pltpu


def _round_up(x, m):
    return (x + m - 1) // m * m


def _pick_tile_rows(n_rows, requested):
    """bf16/MXU-friendly row tile.

    Multiple of 16 (bf16 native sublane pack), snapped to a multiple of 256 when
    large (fills the 256-wide MXU on v6e/v7x), never larger than the row count,
    and capped so the 1-D grid keeps >= 4 steps on big inputs so v7x megacore
    gets both TensorCores working.
    """
    if n_rows <= 16:
        return n_rows                      # full-extent block is always legal
    tm = max(16, min(requested, n_rows))
    tm = (tm // 16) * 16                   # multiple of 16, never exceeds n_rows
    if tm >= 256:
        tm = (tm // 256) * 256
    if n_rows >= 4 * 256:
        four_way = max(256, _round_up(pl.cdiv(n_rows, 4), 256))
        tm = min(tm, four_way)
    return tm


def patch_embed_kernel(x_ref, w_ref, b_ref, o_ref):
    """One row-tile of the patch-embedding GEMM.

    x_ref: (TM, K)  patch pixels, native dtype (cast here, not via an HBM pass)
    w_ref: (K, Dp)  bf16 flattened conv weight (in_features, out_features)
    b_ref: (1, Dp)  f32 bias
    o_ref: (TM, Dp) bf16 output (f32 MXU accumulation + f32 bias, cast on store)
    """
    x = x_ref[...].astype(w_ref.dtype)                       # VALU slot has slack
    acc = jnp.dot(x, w_ref[...], preferred_element_type=jnp.float32)
    o_ref[...] = (acc + b_ref[...]).astype(o_ref.dtype)


def prepare_patch_embedding_params(conv_weight, conv_bias, *,
                                   compute_dtype=jnp.bfloat16):
    """Once-per-model preprocessing of the Conv3d weight/bias.

    Conv3d with kernel == stride over a single kernel-sized window is a linear
    layer on the flattened (c, t, h, w) patch, so the weight collapses to a
    (K, D) matrix. Only D is padded to a lane multiple (128); K stays exact.
    """
    D, C, T, P, _ = conv_weight.shape
    K = C * T * P * P
    Dp = _round_up(D, 128)
    w2d = conv_weight.reshape(D, K).T                         # (K, D) — matches torch flatten order
    w_p = jnp.pad(w2d, ((0, 0), (0, Dp - D))).astype(compute_dtype)          # (K, Dp)
    b_p = jnp.pad(conv_bias.astype(jnp.float32).reshape(1, D),
                  ((0, 0), (0, Dp - D)))                                     # (1, Dp) f32
    return w_p, b_p


def univitar_patch_embeddings(pixel_values, w_p, b_p, *, embed_dim,
                              out_dtype=None, tile_rows=512):
    """Pallas implementation of UniViTARVisionEmbeddings.forward.

    pixel_values: any shape whose size is a multiple of K = 3*T*P*P
                  (torch does `pixel_values.view(-1, 3, T, P, P)`).
    w_p, b_p    : prepared by prepare_patch_embedding_params.
    Returns (1, N, embed_dim) embeddings (bf16 by default).
    """
    K, Dp = w_p.shape
    D = embed_dim
    out_dtype = w_p.dtype if out_dtype is None else out_dtype

    # Per patch, the (c, t, h, w) block is row-major, so a flat reshape to
    # (-1, K) matches torch's view exactly.  This reshape is the ONLY
    # wrapper-side op on the activation (no pad, no cast, no extra HBM pass).
    x = pixel_values.reshape(-1, K)
    N = x.shape[0]

    tm = _pick_tile_rows(N, tile_rows)
    grid = (pl.cdiv(N, tm),)          # ragged last row block handled by Pallas masking

    in_itm = jnp.dtype(x.dtype).itemsize
    w_itm = jnp.dtype(w_p.dtype).itemsize
    out_itm = jnp.dtype(out_dtype).itemsize
    # The pipeline reserves 2 buffers per operand.  Weight/bias blocks are
    # constant (index_map -> (0, 0)) so they are DMA'd only once, but their 2x
    # footprint is still counted so the explicit limit is honest on v5e/v7x.
    vmem_bytes = (2 * tm * K * in_itm        # streamed x tile
                  + 2 * K * Dp * w_itm       # resident weight
                  + 2 * Dp * 4               # resident bias (f32)
                  + 2 * tm * Dp * out_itm)   # streamed output tile
    vmem_limit = int(min(56 * 2**20, max(vmem_bytes + (2 << 20), 4 * 2**20)))

    cost = pl.CostEstimate(
        flops=2 * N * K * Dp,
        transcendentals=0,
        bytes_accessed=int(x.size * in_itm + w_p.size * w_itm
                           + b_p.size * 4 + N * Dp * out_itm),
    )

    out = pl.pallas_call(
        patch_embed_kernel,
        out_shape=jax.ShapeDtypeStruct((N, Dp), out_dtype),
        grid=grid,
        in_specs=[
            pl.BlockSpec((tm, K), lambda i: (i, 0)),   # stream token tiles; true K (full dim)
            pl.BlockSpec((K, Dp), lambda i: (0, 0)),   # weight: constant block, VMEM-resident
            pl.BlockSpec((1, Dp), lambda i: (0, 0)),   # bias: constant block
        ],
        out_specs=pl.BlockSpec((tm, Dp), lambda i: (i, 0)),
        compiler_params=pltpu.CompilerParams(
            dimension_semantics=("parallel",),
            vmem_limit_bytes=vmem_limit,
        ),
        cost_estimate=cost,
    )(x, w_p, b_p)

    if Dp != D:
        out = out[:, :D]   # no-op copy-free for real configs (hidden_size % 128 == 0)
    return out.reshape(1, N, D)


# ----------------------- pure-JAX reference (for validation) -----------------------
def reference_embeddings(pixel_values, conv_weight, conv_bias):
    D, C, T, P, _ = conv_weight.shape
    K = C * T * P * P
    x = pixel_values.reshape(-1, K).astype(jnp.float32)
    w = conv_weight.reshape(D, K).astype(jnp.float32)
    out = x @ w.T + conv_bias.astype(jnp.float32)
    return out.reshape(1, -1, D)


if __name__ == "__main__":
    # Small config consistent with the module: num_channels=3,
    # temporal_patch_size=2, patch_size=4 (stand-in for 14), hidden_size=32,
    # patch_embedding_bias=True.  N=50 patches exercises a ragged last tile.
    C, T, P = 3, 2, 4
    D = 32
    N = 50

    key = jax.random.PRNGKey(0)
    k1, k2, k3 = jax.random.split(key, 3)
    pixel_values = jax.random.normal(k1, (N, C, T, P, P), jnp.float32)
    conv_weight = 0.05 * jax.random.normal(k2, (D, C, T, P, P), jnp.float32)
    conv_bias = 0.05 * jax.random.normal(k3, (D,), jnp.float32)

    # Weight preprocessing happens once (hoisted out of the per-forward path).
    w_p, b_p = prepare_patch_embedding_params(conv_weight, conv_bias)
    ref = reference_embeddings(pixel_values, conv_weight, conv_bias)

    # tile_rows=16 -> 4-step grid with a ragged last block; tile_rows=512 ->
    # default large-tile path (capped to the row count here).
    for tile_rows in (16, 512):
        out = univitar_patch_embeddings(pixel_values, w_p, b_p,
                                        embed_dim=D, tile_rows=tile_rows)
        out = jax.block_until_ready(out)
        assert out.shape == (1, N, D), out.shape
        # bf16 operands + bf16 output with f32 accumulation -> ~1e-2 error here.
        np.testing.assert_allclose(np.asarray(out.astype(jnp.float32)),
                                   np.asarray(ref), rtol=3e-2, atol=3e-2)

    # TODO(synk): the torch module also sets `self.num_patches` as a Python
    # attribute; callers can recover it as output.shape[1].
    print("KERNEL_OK")
</pallas_src>

<mosaic_0001>
module attributes {stable_mosaic.version = 11 : i64} {
  func.func @patch_embed_kernel(%arg0: i32, %arg1: memref<16x96xf32, #tpu.memory_space<vmem>>, %arg2: memref<96x128xbf16, #tpu.memory_space<vmem>>, %arg3: memref<1x128xf32, #tpu.memory_space<vmem>>, %arg4: memref<16x128xbf16, #tpu.memory_space<vmem>>) attributes {dimension_semantics = [#tpu.dimension_semantics<parallel>], iteration_bounds = array<i64: 4>, scalar_prefetch = 0 : i64, scratch_operands = 0 : i64, tpu.core_type = #tpu.core_type<tc>, window_params = [{transform_indices = @transform_0, window_bounds = array<i64: 16, 96>}, {pipeline_mode = #tpu.pipeline_mode<synchronous>, transform_indices = @transform_1, window_bounds = array<i64: 96, 128>}, {pipeline_mode = #tpu.pipeline_mode<synchronous>, transform_indices = @transform_2, window_bounds = array<i64: 1, 128>}, {transform_indices = @transform_3, window_bounds = array<i64: 16, 128>}]} {
    %c0 = arith.constant 0 : index
    %c0_0 = arith.constant 0 : index
    %0 = vector.load %arg1[%c0, %c0_0] : memref<16x96xf32, #tpu.memory_space<vmem>>, vector<16x96xf32>
    %1 = arith.truncf %0 : vector<16x96xf32> to vector<16x96xbf16>
    %c0_1 = arith.constant 0 : index
    %c0_2 = arith.constant 0 : index
    %2 = vector.load %arg2[%c0_1, %c0_2] : memref<96x128xbf16, #tpu.memory_space<vmem>>, vector<96x128xbf16>
    %cst = arith.constant dense<0.000000e+00> : vector<16x128xf32>
    %3 = tpu.matmul %1, %2, %cst {dimension_numbers = #tpu.dot_dimension_numbers<[1], [0], [0], [1], [0, 0, 1, 1], [], []>} : vector<16x96xbf16>, vector<96x128xbf16>, vector<16x128xf32> -> vector<16x128xf32>
    %c0_3 = arith.constant 0 : index
    %c0_4 = arith.constant 0 : index
    %4 = vector.load %arg3[%c0_3, %c0_4] : memref<1x128xf32, #tpu.memory_space<vmem>>, vector<1x128xf32>
    %5 = vector.broadcast %4 : vector<1x128xf32> to vector<16x128xf32>
    %6 = arith.addf %3, %5 : vector<16x128xf32>
    %7 = arith.truncf %6 : vector<16x128xf32> to vector<16x128xbf16>
    %c0_5 = arith.constant 0 : index
    %c0_6 = arith.constant 0 : index
    %8 = vector.load %arg4[%c0_5, %c0_6] : memref<16x128xbf16, #tpu.memory_space<vmem>>, vector<16x128xbf16>
    tpu.vector_store %arg4[%c0_5, %c0_6], %7 {strides = array<i32>} : memref<16x128xbf16, #tpu.memory_space<vmem>>, vector<16x128xbf16>,
    return
  }
  func.func @transform_0(%arg0: i32) -> (i32, i32) {
    %c0_i32 = arith.constant 0 : i32
    %c0_i32_0 = arith.constant 0 : i32
    return %arg0, %c0_i32 : i32, i32
  }
  func.func @transform_1(%arg0: i32) -> (i32, i32) {
    %c0_i32 = arith.constant 0 : i32
    %c0_i32_0 = arith.constant 0 : i32
    %c0_i32_1 = arith.constant 0 : i32
    return %c0_i32, %c0_i32_0 : i32, i32
  }
  func.func @transform_2(%arg0: i32) -> (i32, i32) {
    %c0_i32 = arith.constant 0 : i32
    %c0_i32_0 = arith.constant 0 : i32
    %c0_i32_1 = arith.constant 0 : i32
    return %c0_i32, %c0_i32_0 : i32, i32
  }
  func.func @transform_3(%arg0: i32) -> (i32, i32) {
    %c0_i32 = arith.constant 0 : i32
    %c0_i32_0 = arith.constant 0 : i32
    return %arg0, %c0_i32 : i32, i32
  }
}

</mosaic_0001>

<llo_original>
// kernel: tpu_custom_call.1
$region0: #{tpu_custom_call.1}
  #allocation0 [shape = 'u32[]', space=smem, size = 0x4, offset = 0x4, fixed_abs, tag = 'smem constant byte address 0x4 - core index']
  #allocation1 [shape = 'u32[144,128]{1,0:T(1,128)}', space=vmem, size = 0x12000, scoped, tag = 'internal scratch']
  %s0 = inlined_call_operand.hbm [shape: f32[50,96], index: 0, kind: input, shape index: {}]
  %s1 = inlined_call_operand.hbm [shape: bf16[96,128], index: 1, kind: input, shape index: {}]
  %s2 = inlined_call_operand.vmem [shape: f32[1,128], index: 2, kind: input, shape index: {}]
  %s3 = inlined_call_operand.hbm [shape: bf16[50,128], index: 3, kind: output, shape index: {}]
  %s4 = sld [smem:[#allocation0]]
  $region53: #{tpu_custom_call.1} parent=0
    _
  %s6 = ssub.s32 1, %s4
  %s7 = scalar_select 0, %s6, %s4
  $region1: #{tpu_custom_call.1} parent=0
    #allocation2 [shape = 'u8[16384]{0}', space=vmem, size = 0x4000, scoped, tag = 'input window, operand 0']
    #allocation3 [shape = 's32[2]{0}', space=sflag, size = 0x8, scoped, tag = 'scoped memory for tpu_custom_call.1']
    #allocation4 [shape = 's32[2]{0}', space=sflag, size = 0x8, scoped, tag = 'scoped memory for tpu_custom_call.1']
    #allocation5 [shape = 'u8[24576]{0}', space=vmem, size = 0x6000, scoped, tag = 'input window, operand 1, single buffered']
    #allocation6 [shape = 's32[1]{0}', space=sflag, size = 0x4, scoped, tag = 'scoped memory for tpu_custom_call.1']
    #allocation7 [shape = 'u8[8192]{0}', space=vmem, size = 0x2000, scoped, tag = 'output window, operand 0']
    %8 = vsyncpa [#allocation3], 0
    %s9 = scalar_lea.sflag [#allocation3], 1
    %10 = vsyncpa %s9, 0
    %11 = vsyncpa [#allocation6], 0
    %12 = vsyncpa [#allocation4], 0
    %s13 = scalar_lea.sflag [#allocation4], 1
    %14 = vsyncpa %s13, 0
    loop: start=0, step=1, limit=6
    $region2: #{tpu_custom_call.1} parent=1 // loop_pre_header
      _
    $region3: #{tpu_custom_call.1} parent=1 // loop_header
      %s16 = sphi 0, %s20
      %p17 = scmp.ge.s32.totalorder %s16, 6
      %s26 = sphi 0, %s28
      %s29 = sphi 0, %s26
      %s30 = sphi 0, %s29
      %s46 = sphi 0, %s30
      %s50 = sphi 0, %s50
      %s52 = sphi 0, %s50
      %s53 = sphi 0, %s52
      %s67 = sphi 0, %s53
      %s71 = sphi 0, %s71
      %s73 = sphi 0, %s71
      %s74 = sphi 0, %s73
      %s88 = sphi 0, %s74
      %s94 = sphi 0, %s96
      %s97 = sphi 0, %s94
      %s98 = sphi 0, %s97
      %s114 = sphi 0, %s98
    $region4: #{tpu_custom_call.1} parent=1 // loop_header_branch
      %19 = sbr.rel (%p17) target = $region8
    $region5: #{tpu_custom_call.1} parent=1 // loop_body
      %s21 = ssub.s32 %s16, 1
      %s22 = ssub.s32 %s16, 2
      %s23 = sadd.s32 %s16, 1
      %s24 = ssub.s32 %s16, %s23
      %p25 = scmp.eq.s32.totalorder %s24, 0
      %s27 = sadd.s32 %s26, 1
      %s28 = scalar_select %p25, %s26, %s27
      %p31 = pneg %p25
      %p32 = scmp.eq.s32.totalorder %s16, 3
      %p33 = por %p31, %p32
      %p34 = scmp.ne.s32.totalorder %s26, %s29
      %p35 = scmp.eq.s32.totalorder %s16, 0
      %p36 = por %p34, %p35
      %p37 = scmp.ne.s32.totalorder %s26, %s29
      %p38 = scmp.eq.s32.totalorder %s21, 3
      %p39 = por %p37, %p38
      %p40 = scmp.ne.s32.totalorder %s29, %s30
      %p41 = scmp.eq.s32.totalorder %s21, 0
      %p42 = por %p40, %p41
      %p43 = scmp.ne.s32.totalorder %s29, %s30
      %p44 = scmp.eq.s32.totalorder %s22, 3
      %p45 = por %p43, %p44
      %p47 = scmp.ne.s32.totalorder %s30, %s46
      %p48 = scmp.eq.s32.totalorder %s22, 0
      %p49 = por %p47, %p48
      %s51 = sadd.s32 %s50, 1
      %p54 = scmp.eq.s32.totalorder %s16, 3
      %p55 = scmp.ne.s32.totalorder %s50, %s52
      %p56 = scmp.eq.s32.totalorder %s16, 0
      %p57 = por %p55, %p56
      %p58 = scmp.ne.s32.totalorder %s50, %s52
      %p59 = scmp.eq.s32.totalorder %s21, 3
      %p60 = por %p58, %p59
      %p61 = scmp.ne.s32.totalorder %s52, %s53
      %p62 = scmp.eq.s32.totalorder %s21, 0
      %p63 = por %p61, %p62
      %p64 = scmp.ne.s32.totalorder %s52, %s53
      %p65 = scmp.eq.s32.totalorder %s22, 3
      %p66 = por %p64, %p65
      %p68 = scmp.ne.s32.totalorder %s53, %s67
      %p69 = scmp.eq.s32.totalorder %s22, 0
      %p70 = por %p68, %p69
      %s72 = sadd.s32 %s71, 1
      %p75 = scmp.eq.s32.totalorder %s16, 3
      %p76 = scmp.ne.s32.totalorder %s71, %s73
      %p77 = scmp.eq.s32.totalorder %s16, 0
      %p78 = por %p76, %p77
      %p79 = scmp.ne.s32.totalorder %s71, %s73
      %p80 = scmp.eq.s32.totalorder %s21, 3
      %p81 = por %p79, %p80
      %p82 = scmp.ne.s32.totalorder %s73, %s74
      %p83 = scmp.eq.s32.totalorder %s21, 0
      %p84 = por %p82, %p83
      %p85 = scmp.ne.s32.totalorder %s73, %s74
      %p86 = scmp.eq.s32.totalorder %s22, 3
      %p87 = por %p85, %p86
      %p89 = scmp.ne.s32.totalorder %s74, %s88
      %p90 = scmp.eq.s32.totalorder %s22, 0
      %p91 = por %p89, %p90
      %s92 = ssub.s32 %s16, %s23
      %p93 = scmp.eq.s32.totalorder %s92, 0
      %s95 = sadd.s32 %s94, 1
      %s96 = scalar_select %p93, %s94, %s95
      %p99 = pneg %p93
      %p100 = scmp.eq.s32.totalorder %s16, 3
      %p101 = por %p99, %p100
      %p102 = scmp.ne.s32.totalorder %s94, %s97
      %p103 = scmp.eq.s32.totalorder %s16, 0
      %p104 = por %p102, %p103
      %p105 = scmp.ne.s32.totalorder %s94, %s97
      %p106 = scmp.eq.s32.totalorder %s21, 3
      %p107 = por %p105, %p106
      %p108 = scmp.ne.s32.totalorder %s97, %s98
      %p109 = scmp.eq.s32.totalorder %s21, 0
      %p110 = por %p108, %p109
      %p111 = scmp.ne.s32.totalorder %s97, %s98
      %p112 = scmp.eq.s32.totalorder %s22, 3
      %p113 = por %p111, %p112
      %p115 = scmp.ne.s32.totalorder %s98, %s114
      %p116 = scmp.eq.s32.totalorder %s22, 0
      %p117 = por %p115, %p116
      %p118 = scmp.le.s32.totalorder 1, %s16
      %p119 = scmp.lt.s32.totalorder %s16, 5
      %p120 = pnand %p118, %p119
      %p121 = pneg %p120
      // Predicated region
      $region9: #{tpu_custom_call.1} parent=5 // pred_check
        _
      $region10: #{tpu_custom_call.1} parent=5 // pred_check_branch
        %123 = sbr.rel (%p120) target = $region12
      $region11: #{tpu_custom_call.1} parent=5 // pred_region
        %s124 = ssub.s32 %s16, 1
        // Predicated region
        $region13: #{tpu_custom_call.1} parent=11 // pred_check
          %p125 = pneg %p63
        $region14: #{tpu_custom_call.1} parent=11 // pred_check_branch
          %127 = sbr.rel (%p125) target = $region16
        $region15: #{tpu_custom_call.1} parent=11 // pred_region
          %s129 = ssub.s32 768, 768
          %130 = vsyncadd [#allocation6], %s129
          %s131 = sshll.u32 [#allocation5], 4
          %s132 = int_to_ptr.vmem [resolvable:$true] %s131
          %137 = dma.hbm_to_vmem [thread:$0]  %s1, 768, %s132, [#allocation6], 64, 64, 4
        $region16: #{tpu_custom_call.1} parent=11 // pred_fallthru
          _
        // Predicated region
        $region17: #{tpu_custom_call.1} parent=11 // pred_check
          %p138 = pneg %p84
        $region18: #{tpu_custom_call.1} parent=11 // pred_check_branch
          %140 = sbr.rel (%p138) target = $region20
        $region19: #{tpu_custom_call.1} parent=11 // pred_region
          _
        $region20: #{tpu_custom_call.1} parent=11 // pred_fallthru
          _
      $region12: #{tpu_custom_call.1} parent=5 // pred_fallthru
        _
      %p141 = scmp.lt.s32.totalorder %s16, 4
      // Predicated region
      $region21: #{tpu_custom_call.1} parent=5 // pred_check
        %p142 = pneg %p141
      $region22: #{tpu_custom_call.1} parent=5 // pred_check_branch
        %144 = sbr.rel (%p142) target = $region24
      $region23: #{tpu_custom_call.1} parent=5 // pred_region
        // Predicated region
        $region25: #{tpu_custom_call.1} parent=23 // pred_check
          %p145 = pneg %p36
        $region26: #{tpu_custom_call.1} parent=23 // pred_check_branch
          %147 = sbr.rel (%p145) target = $region28
        $region27: #{tpu_custom_call.1} parent=23 // pred_region
          %s148 = sand.u32 %s26, 1
          %s149 = scalar_lea.sflag [#allocation3], %s148
          %s150 = sand.u32 %s26, 1
          %s151 = smul.addr %s150, 16
          %s152 = scalar_lea.vmem [#allocation2], %s151
          %s153 = smul.u32 2, %s16
          %s154 = ssub.s32 7, %s153
          %p155 = scmp.lt.s32.totalorder %s154, 2
          %s156 = scalar_select %p155, %s154, 2
          %s157 = smul.u32 128, %s156
          %s159 = ssub.s32 256, %s157
          %160 = vsyncadd %s149, %s159
          %p161 = scmp.ne.s32.totalorder 0, %s157
          %s162 = smul.addr %s153, 128
          %s163 = scalar_lea.hbm %s0, %s162
          %s164 = smul.u32 8, %s156
          %s165 = sshll.u32 %s152, 4
          %s166 = int_to_ptr.vmem [resolvable:$true] %s165
          %s167 = sshll.u32 %s164, 4
          %171 = dma.hbm_to_vmem [thread:$0]  (%p161), %s163, %s167, %s166, %s149, 128, 128, 8
        $region28: #{tpu_custom_call.1} parent=23 // pred_fallthru
          _
      $region24: #{tpu_custom_call.1} parent=5 // pred_fallthru
        _
      %p172 = scmp.le.s32.totalorder 1, %s16
      %p173 = scmp.lt.s32.totalorder %s16, 5
      %p174 = pnand %p172, %p173
      %p175 = pneg %p174
      // Predicated region
      $region29: #{tpu_custom_call.1} parent=5 // pred_check
        _
      $region30: #{tpu_custom_call.1} parent=5 // pred_check_branch
        %177 = sbr.rel (%p174) target = $region32
      $region31: #{tpu_custom_call.1} parent=5 // pred_region
        %s178 = ssub.s32 %s16, 1
        %s179 = sand.u32 %s29, 1
        %s180 = scalar_lea.sflag [#allocation3], %s179
        %s181 = sand.u32 %s29, 1
        %s182 = smul.addr %s181, 16
        %s183 = scalar_lea.vmem [#allocation2], %s182
        // Predicated region
        $region33: #{tpu_custom_call.1} parent=31 // pred_check
          %p184 = pneg %p42
        $region34: #{tpu_custom_call.1} parent=31 // pred_check_branch
          %186 = sbr.rel (%p184) target = $region36
        $region35: #{tpu_custom_call.1} parent=31 // pred_region
          %187 = dma.done %s180, 256
        $region36: #{tpu_custom_call.1} parent=31 // pred_fallthru
          _
        // Predicated region
        $region37: #{tpu_custom_call.1} parent=31 // pred_check
          %p188 = pneg %p63
        $region38: #{tpu_custom_call.1} parent=31 // pred_check_branch
          %190 = sbr.rel (%p188) target = $region40
        $region39: #{tpu_custom_call.1} parent=31 // pred_region
          %191 = dma.done [#allocation6], 768
        $region40: #{tpu_custom_call.1} parent=31 // pred_fallthru
          _
        %s192 = sand.u32 %s29, 1
        %s193 = scalar_lea.sflag [#allocation3], %s192
        %s194 = sand.u32 %s29, 1
        %s195 = smul.addr %s194, 16
        %s196 = scalar_lea.vmem [#allocation2], %s195
        %p197 = pneg %p42
        %p198 = pneg %p39
        %p199 = pneg %p63
        %p200 = pneg %p60
        %p201 = pneg %p84
        %p202 = pneg %p81
        %p203 = pneg %p110
        %p204 = pneg %p107
        %s205 = sand.u32 %s97, 1
        %s206 = scalar_lea.sflag [#allocation4], %s205
        %s207 = sand.u32 %s97, 1
        %s208 = smul.addr %s207, 8
        %s209 = scalar_lea.vmem [#allocation7], %s208
        %s210 = smul.u32 2, %s21
        %s211 = ssub.s32 7, %s210
        %p212 = scmp.lt.s32.totalorder %s211, 2
        %s213 = scalar_select %p212, %s211, 2
        %s214 = smul.u32 128, %s213
        %s215 = smul.u32 2, %s21
        %s216 = ssub.s32 7, %s215
        %p217 = scmp.lt.s32.totalorder %s216, 2
        %s218 = scalar_select %p217, %s216, 2
        %s219 = smul.u32 64, %s218
        %v221 = vld [vmem:[%s183] sm:$0xff]
        %v222 = vld [vmem:[%s183 + $0x8] sm:$0xff]
        %v223 = vpack.c.bf16 %v222, %v221
        %v224 = vld [vmem:[#allocation5] sm:$0xf]
        %v225 = vld [vmem:[#allocation5 + $0x4] sm:$0xf]
        %v226 = vld [vmem:[#allocation5 + $0x8] sm:$0xf]
        %v227 = vld [vmem:[#allocation5 + $0xc] sm:$0xf]
        %v228 = vld [vmem:[#allocation5 + $0x10] sm:$0xf]
        %v229 = vld [vmem:[#allocation5 + $0x14] sm:$0xf]
        %v230 = vld [vmem:[#allocation5 + $0x18] sm:$0xf]
        %v231 = vld [vmem:[#allocation5 + $0x1c] sm:$0xf]
        %v232 = vld [vmem:[#allocation5 + $0x20] sm:$0xf]
        %v233 = vld [vmem:[#allocation5 + $0x24] sm:$0xf]
        %v234 = vld [vmem:[#allocation5 + $0x28] sm:$0xf]
        %v235 = vld [vmem:[#allocation5 + $0x2c] sm:$0xf]
        %v236 = vld [vmem:[%s2] sm:$0x1]
        %v238 = vlaneseq
        %v239 = vshrl.u32 %v238, 7
        %v240 = vsub.s32 0, %v239
        %v241 = vrot.slane %v236, %v240
        %v255 = vunpack.c.l.b16 %v224
        %v256 = vunpack.c.l.b16 %v225
        %v257 = vunpack.c.l.b16 %v226
        %v258 = vunpack.c.l.b16 %v227
        %v259 = vunpack.c.l.b16 %v228
        %v260 = vunpack.c.l.b16 %v229
        %v261 = vunpack.c.l.b16 %v230
        %v262 = vunpack.c.l.b16 %v231
        %v263 = vunpack.c.l.b16 %v232
        %v264 = vunpack.c.l.b16 %v233
        %v265 = vunpack.c.l.b16 %v234
        %v266 = vunpack.c.l.b16 %v235
        %v267 = vpack.c.b16 %v256, %v255
        %v268 = vpack.c.b16 %v258, %v257
        %v269 = vpack.c.b16 %v260, %v259
        %v270 = vpack.c.b16 %v262, %v261
        %v271 = vpack.c.b16 %v264, %v263
        %v272 = vpack.c.b16 %v266, %v265
        %vm279 = vcmask 785408
        %v281 = vsel %vm279, %v223, 0
        %283 = vmatprep.subr.bf16.mxu0 0
        %284 = vmatpush1.bf16.msra.mxu0 0
        %285 = vmatprep.subr.bf16.mxu0 0
        %286 = vmatpush1.bf16.msra.mxu0 0
        %287 = vmatprep.subr.bf16.mxu0 0
        %288 = vmatpush1.bf16.msra.mxu0 %v272
        %289 = vmatprep.subr.bf16.mxu0 0
        %290 = vmatpush1.bf16.msra.mxu0 %v271
        %291 = vmatprep.subr.bf16.mxu0 0
        %292 = vmatpush1.bf16.msra.mxu0 %v270
        %293 = vmatprep.subr.bf16.mxu0 0
        %294 = vmatpush1.bf16.msra.mxu0 %v269
        %295 = vmatprep.subr.bf16.mxu0 0
        %296 = vmatpush1.bf16.msra.mxu0 %v268
        %297 = vmatprep.subr.bf16.mxu0 0
        %298 = vmatpush1.bf16.msra.mxu0 %v267
        %299 = vmatprep.subr.bf16.mxu0 0
        %300 = vmatpush2.bf16.msra.mxu0 0
        %301 = vmatprep.subr.bf16.mxu0 0
        %302 = vmatpush2.bf16.msra.mxu0 0
        %303 = vmatprep.subr.bf16.mxu0 0
        %304 = vmatpush2.bf16.msra.mxu0 0
        %305 = vmatprep.subr.bf16.mxu0 0
        %306 = vmatpush2.bf16.msra.mxu0 0
        %307 = vmatprep.subr.bf16.mxu0 0
        %308 = vmatpush2.bf16.msra.mxu0 0
        %309 = vmatprep.subr.bf16.mxu0 0
        %310 = vmatpush2.bf16.msra.mxu0 0
        %311 = vmatprep.subr.bf16.mxu0 0
        %312 = vmatpush2.bf16.msra.mxu0 0
        %313 = vmatprep.subr.bf16.mxu0 0
        %314 = vmatpush2.bf16.msra.mxu0 0
        %315 = vmatprep.mubr.bf16.mxu0 0
        %316 = vmatmul.mubr.bf16.gmra.mxu0 %v281
        %v317 = vpop.f32.mrf.mxu0
        %v318 = vadd.f32 %v241, %v317
        %v319 = vpop.f32.mrf.mxu0
        %v320 = vpop.f32.mrf.mxu0
        %v321 = vadd.f32 %v241, %v320
        %v322 = vpop.f32.mrf.mxu0
        %323 = vdwg.mxu0
        %v324 = vpack.c.bf16 %v321, %v318
        %v326 = vunpack.c.l.b16 %v324
        %v327 = vunpack.c.h.b16 %v324
        %v328 = vpack.c.b16 %v326, %v326
        %v329 = vpack.c.b16 %v327, %v327
        %332 = vst [vmem:[%s209] sm:$0xf] %v328
        %333 = vst [vmem:[%s209 + $0x4] sm:$0xf] %v329
        %s334 = sand.u32 %s97, 1
        %s335 = scalar_lea.sflag [#allocation4], %s334
        %s336 = sand.u32 %s97, 1
        %s337 = smul.addr %s336, 8
        %s338 = scalar_lea.vmem [#allocation7], %s337
        // Predicated region
        $region41: #{tpu_custom_call.1} parent=31 // pred_check
          %p339 = pneg %p107
        $region42: #{tpu_custom_call.1} parent=31 // pred_check_branch
          %341 = sbr.rel (%p339) target = $region44
        $region43: #{tpu_custom_call.1} parent=31 // pred_region
          %s342 = smul.u32 2, %s21
          %s343 = ssub.s32 7, %s342
          %p344 = scmp.lt.s32.totalorder %s343, 2
          %s345 = scalar_select %p344, %s343, 2
          %s346 = smul.u32 64, %s345
          %s348 = ssub.s32 128, %s346
          %349 = vsyncadd %s335, %s348
          %p350 = scmp.ne.s32.totalorder 0, %s346
          %s351 = smul.addr %s342, 64
          %s352 = scalar_lea.hbm %s3, %s351
          %s353 = smul.u32 4, %s345
          %s354 = sshll.u32 %s338, 4
          %s355 = int_to_ptr.vmem [resolvable:$true] %s354
          %s356 = sshll.u32 %s353, 4
          %360 = dma.vmem_to_hbm [thread:$0]  (%p350), %s355, %s356, %s352, %s335, 64, 64, 4
        $region44: #{tpu_custom_call.1} parent=31 // pred_fallthru
          _
      $region32: #{tpu_custom_call.1} parent=5 // pred_fallthru
        _
      %p361 = scmp.le.s32.totalorder 2, %s16
      // Predicated region
      $region45: #{tpu_custom_call.1} parent=5 // pred_check
        %p362 = pneg %p361
      $region46: #{tpu_custom_call.1} parent=5 // pred_check_branch
        %364 = sbr.rel (%p362) target = $region48
      $region47: #{tpu_custom_call.1} parent=5 // pred_region
        %s365 = ssub.s32 %s16, 2
        // Predicated region
        $region49: #{tpu_custom_call.1} parent=47 // pred_check
          %p366 = pneg %p113
        $region50: #{tpu_custom_call.1} parent=47 // pred_check_branch
          %368 = sbr.rel (%p366) target = $region52
        $region51: #{tpu_custom_call.1} parent=47 // pred_region
          %s369 = sand.u32 %s98, 1
          %s370 = scalar_lea.sflag [#allocation4], %s369
          %s371 = sand.u32 %s98, 1
          %s372 = smul.addr %s371, 8
          %s373 = scalar_lea.vmem [#allocation7], %s372
          %374 = dma.done %s370, 128
        $region52: #{tpu_custom_call.1} parent=47 // pred_fallthru
          _
      $region48: #{tpu_custom_call.1} parent=5 // pred_fallthru
        _
    $region6: #{tpu_custom_call.1} parent=1 // loop_footer
      %s20 = sadd.s32 1, %s16
    $region7: #{tpu_custom_call.1} parent=1 // loop_footer_branch
      %15 = sbr.rel target = $region3
    $region8: #{tpu_custom_call.1} parent=1 // loop_exit
      _
    %375 = vsyncpa [#allocation3], 1
    %s376 = scalar_lea.sflag [#allocation3], 1
    %377 = vsyncpa %s376, 1
    %378 = vsyncpa [#allocation6], 1
    %379 = vsyncpa [#allocation4], 1
    %s380 = scalar_lea.sflag [#allocation4], 1
    %381 = vsyncpa %s380, 1

</llo_original>
